<compile_context>
chip_gen: v7x
topology: tpu7x:2x2x1
jax: 0.10.0
libtpu: 0.0.40
codegen_flags: <defaults>
</compile_context>

<pallas_src>
import functools

import jax
import jax.numpy as jnp
from jax.experimental import pallas as pl
from jax.experimental.pallas import tpu as pltpu


# ---------------------------------------------------------------------------
# Kernels
# ---------------------------------------------------------------------------

def _avg_clip_prob_kernel(score_ref, out_ref, *, inv_k):
    # score_ref: (TN, K, C) block in VMEM; out_ref: (TN, C).
    # Rows past N in the last (ragged) block hold undefined data; they are
    # computed but their write-back is clipped by Pallas (rows independent).
    s = score_ref[...].astype(jnp.float32)
    # numerically-stable softmax over the class axis (last dim)
    s = s - jnp.max(s, axis=-1, keepdims=True)
    e = jnp.exp(s)
    denom = jnp.sum(e, axis=-1, keepdims=True)
    p = e / denom                      # exact: HBM-bound kernel, exactness is free
    # mean over clips folded into a constant (1/K) multiply at the store.
    out_ref[...] = (jnp.sum(p, axis=1) * inv_k).astype(out_ref.dtype)


def _avg_clip_score_kernel(score_ref, out_ref, *, inv_k):
    s = score_ref[...].astype(jnp.float32)
    out_ref[...] = (jnp.sum(s, axis=1) * inv_k).astype(out_ref.dtype)


# ---------------------------------------------------------------------------
# Wrapper
# ---------------------------------------------------------------------------

# Per-step VMEM budget used to size the batch tile (input double buffer +
# output double buffer + in-kernel f32 temporaries).
_DEFAULT_TILE_BUDGET_BYTES = 16 * 1024 * 1024
# Below this total size a pallas_call is pure overhead; use fused XLA instead.
_PALLAS_MIN_BYTES = 256 * 1024


def average_clip(cls_score, average_clips='prob', *, force_pallas=False,
                 tile_budget_bytes=_DEFAULT_TILE_BUDGET_BYTES):
    """Pallas equivalent of BaseRecognizer.average_clip.

    Args:
        cls_score: jnp.ndarray of shape [N, num_clips, num_classes].
        average_clips: 'prob' | 'score' | None.
        force_pallas: bypass the small-input XLA fallback (for testing).
        tile_budget_bytes: VMEM budget used to size the batch tile.
    """
    assert cls_score.ndim == 3
    if average_clips not in ['score', 'prob', None]:
        raise ValueError(
            f'{average_clips} is not supported. Supported: ["score", "prob", None]')
    if average_clips is None:
        return cls_score

    n, k, c = cls_score.shape
    itemsize = cls_score.dtype.itemsize

    # Tiny inputs: kernel launch + DMA setup overhead dominates — let XLA fuse it.
    if (not force_pallas and n * k * c * itemsize < _PALLAS_MIN_BYTES):
        if average_clips == 'prob':
            return jnp.mean(jax.nn.softmax(cls_score, axis=2), axis=1)
        return jnp.mean(cls_score, axis=1)

    # Per-batch-row VMEM cost: double-buffered input + output DMA blocks (in the
    # native dtype) plus ~2 live (K, C) f32 temporaries inside the kernel.
    bytes_per_row = (2 * k * c + 2 * c) * itemsize + 2 * k * c * 4
    tn = max(1, tile_budget_bytes // bytes_per_row)
    tn = min(tn, n)

    if n <= 8:
        # Single full-extent block (no sublane-multiple requirement when the
        # block dim equals the full array dim).
        tn = n
    else:
        # Keep >=2 grid steps (>=4 for larger N) so the v7x megacore sharding
        # and the DMA/compute software pipeline actually engage.
        target_steps = 4 if n >= 32 else 2
        cap = max(8, (-(-n // target_steps)) // 8 * 8)
        tn = min(tn, cap)
        tn = max(8, (tn // 8) * 8)     # output-block sublane alignment
    grid = pl.cdiv(n, tn)              # ragged last block: OOB write-back clipped

    inv_k = 1.0 / float(k)
    if average_clips == 'prob':
        kernel = functools.partial(_avg_clip_prob_kernel, inv_k=inv_k)
        transcendentals = n * k * c
    else:
        kernel = functools.partial(_avg_clip_score_kernel, inv_k=inv_k)
        transcendentals = 0

    cost = pl.CostEstimate(
        flops=5 * n * k * c,
        transcendentals=transcendentals,
        bytes_accessed=n * k * c * itemsize + n * c * itemsize,
    )

    return pl.pallas_call(
        kernel,
        out_shape=jax.ShapeDtypeStruct((n, c), cls_score.dtype),
        grid_spec=pltpu.PrefetchScalarGridSpec(
            num_scalar_prefetch=0,
            grid=(grid,),
            # Last two block dims equal the full (K, C) extents -> no (8,128)
            # divisibility requirement and no class-axis padding needed.
            in_specs=[pl.BlockSpec((tn, k, c), lambda i: (i, 0, 0))],
            out_specs=pl.BlockSpec((tn, c), lambda i: (i, 0)),
        ),
        compiler_params=pltpu.CompilerParams(
            dimension_semantics=("parallel",),    # independent batch tiles
            vmem_limit_bytes=48 * 1024 * 1024,    # safe on v5e/v6e/v7x
        ),
        cost_estimate=cost,
    )(cls_score)


# TODO(synk): forward_train / forward_test are abstract (backbone / cls_head come
# from config dicts); _parse_losses is host-side scalar logging + optional
# dist.all_reduce — neither has a concrete tensor computation to lower here.


def _average_clip_ref(cls_score, average_clips='prob'):
    """Pure-JAX reference matching the PyTorch semantics."""
    if average_clips is None:
        return cls_score
    if average_clips == 'prob':
        return jnp.mean(jax.nn.softmax(cls_score, axis=2), axis=1)
    return jnp.mean(cls_score, axis=1)


# ---------------------------------------------------------------------------
# Self-test
# ---------------------------------------------------------------------------

if __name__ == "__main__":
    key = jax.random.PRNGKey(0)
    k1, k2, k3, k4 = jax.random.split(key, 4)

    # Case 1: NTU-like small shape (N=6, K=10 clips, C=60 classes) —
    # single full-extent block, unpadded non-128 class axis, masked output store.
    s1 = jax.random.normal(k1, (6, 10, 60), dtype=jnp.float32)
    out_prob = jax.block_until_ready(average_clip(s1, 'prob', force_pallas=True))
    out_score = jax.block_until_ready(average_clip(s1, 'score', force_pallas=True))
    assert out_prob.shape == (6, 60) and out_score.shape == (6, 60)
    assert jnp.allclose(out_prob, _average_clip_ref(s1, 'prob'), atol=1e-5, rtol=1e-5)
    assert jnp.allclose(out_score, _average_clip_ref(s1, 'score'), atol=1e-5, rtol=1e-5)

    # Case 2: Kinetics-like classes (C=400) with a tiny VMEM budget to force
    # a multi-step grid with a ragged last block (N=20, tn=8 -> grid=3).
    s2 = jax.random.normal(k2, (20, 8, 400), dtype=jnp.float32)
    out2_prob = jax.block_until_ready(
        average_clip(s2, 'prob', force_pallas=True, tile_budget_bytes=64 * 1024))
    out2_score = jax.block_until_ready(
        average_clip(s2, 'score', force_pallas=True, tile_budget_bytes=64 * 1024))
    assert out2_prob.shape == (20, 400) and out2_score.shape == (20, 400)
    assert jnp.allclose(out2_prob, _average_clip_ref(s2, 'prob'), atol=1e-5, rtol=1e-5)
    assert jnp.allclose(out2_score, _average_clip_ref(s2, 'score'), atol=1e-5, rtol=1e-5)

    # Case 3: larger batch with the default budget — tile capped so grid >= 4
    # (megacore-friendly), even division, no padding anywhere.
    s3 = jax.random.normal(k3, (64, 8, 256), dtype=jnp.float32)
    out3 = jax.block_until_ready(average_clip(s3, 'prob', force_pallas=True))
    assert out3.shape == (64, 256)
    assert jnp.allclose(out3, _average_clip_ref(s3, 'prob'), atol=1e-5, rtol=1e-5)

    # Case 4: tiny input takes the fused-XLA fallback path (no Pallas launch);
    # None mode is the identity.
    s4 = jax.random.normal(k4, (2, 8, 128), dtype=jnp.float32)
    out4 = jax.block_until_ready(average_clip(s4, 'prob'))
    assert jnp.allclose(out4, _average_clip_ref(s4, 'prob'), atol=1e-5, rtol=1e-5)
    assert average_clip(s4, None) is s4

    print("KERNEL_OK")
</pallas_src>

<mosaic_0001>
module attributes {stable_mosaic.version = 11 : i64} {
  func.func @_avg_clip_prob_kernel(%arg0: i32, %arg1: memref<6x10x60xf32, #tpu.memory_space<vmem>>, %arg2: memref<6x60xf32, #tpu.memory_space<vmem>>) attributes {dimension_semantics = [#tpu.dimension_semantics<parallel>], iteration_bounds = array<i64: 1>, scalar_prefetch = 0 : i64, scratch_operands = 0 : i64, tpu.core_type = #tpu.core_type<tc>, window_params = [{transform_indices = @transform_0, window_bounds = array<i64: 6, 10, 60>}, {transform_indices = @transform_1, window_bounds = array<i64: 6, 60>}]} {
    %c0 = arith.constant 0 : index
    %c0_0 = arith.constant 0 : index
    %c0_1 = arith.constant 0 : index
    %0 = vector.load %arg1[%c0, %c0_0, %c0_1] : memref<6x10x60xf32, #tpu.memory_space<vmem>>, vector<6x10x60xf32>
    %cst = arith.constant dense<0xFF800000> : vector<6x10xf32>
    %1 = vector.multi_reduction <maximumf>, %0, %cst [2] : vector<6x10x60xf32> to vector<6x10xf32>
    %2 = vector.shape_cast %1 : vector<6x10xf32> to vector<6x10x1xf32>
    %3 = vector.broadcast %2 : vector<6x10x1xf32> to vector<6x10x60xf32>
    %4 = arith.subf %0, %3 : vector<6x10x60xf32>
    %5 = math.exp %4 : vector<6x10x60xf32>
    %cst_2 = arith.constant dense<0.000000e+00> : vector<6x10xf32>
    %6 = vector.multi_reduction <add>, %5, %cst_2 [2] : vector<6x10x60xf32> to vector<6x10xf32>
    %7 = vector.shape_cast %6 : vector<6x10xf32> to vector<6x10x1xf32>
    %8 = vector.broadcast %7 : vector<6x10x1xf32> to vector<6x10x60xf32>
    %9 = arith.divf %5, %8 : vector<6x10x60xf32>
    %cst_3 = arith.constant dense<0.000000e+00> : vector<6x60xf32>
    %10 = vector.multi_reduction <add>, %9, %cst_3 [1] : vector<6x10x60xf32> to vector<6x60xf32>
    %cst_4 = arith.constant 1.000000e-01 : f32
    %11 = vector.broadcast %cst_4 : f32 to vector<6x60xf32>
    %12 = arith.mulf %10, %11 : vector<6x60xf32>
    %c0_5 = arith.constant 0 : index
    %c0_6 = arith.constant 0 : index
    %13 = vector.load %arg2[%c0_5, %c0_6] : memref<6x60xf32, #tpu.memory_space<vmem>>, vector<6x60xf32>
    tpu.vector_store %arg2[%c0_5, %c0_6], %12 {strides = array<i32>} : memref<6x60xf32, #tpu.memory_space<vmem>>, vector<6x60xf32>,
    return
  }
  func.func @transform_0(%arg0: i32) -> (i32, i32, i32) {
    %c0_i32 = arith.constant 0 : i32
    %c0_i32_0 = arith.constant 0 : i32
    %c0_i32_1 = arith.constant 0 : i32
    return %arg0, %c0_i32, %c0_i32_0 : i32, i32, i32
  }
  func.func @transform_1(%arg0: i32) -> (i32, i32) {
    %c0_i32 = arith.constant 0 : i32
    %c0_i32_0 = arith.constant 0 : i32
    return %arg0, %c0_i32 : i32, i32
  }
}

</mosaic_0001>

<llo_original>
// kernel: tpu_custom_call.1
$region0: #{tpu_custom_call.1}
  #allocation0 [shape = 'u32[]', space=smem, size = 0x4, offset = 0x4, fixed_abs, tag = 'smem constant byte address 0x4 - core index']
  #allocation1 [shape = 'u32[144,128]{1,0:T(1,128)}', space=vmem, size = 0x12000, scoped, tag = 'internal scratch']
  %s0 = inlined_call_operand.vmem [shape: f32[6,10,60], index: 0, kind: input, shape index: {}]
  %s1 = inlined_call_operand.hbm [shape: f32[6,60], index: 1, kind: output, shape index: {}]
  %s2 = sld [smem:[#allocation0]]
  $region14: #{tpu_custom_call.1} parent=0
    _
  %s4 = ssub.s32 1, %s2
  %s5 = scalar_select 0, %s4, %s2
  $region1: #{tpu_custom_call.1} parent=0
    #allocation2 [shape = 'u8[4096]{0}', space=vmem, size = 0x1000, scoped, tag = 'output window, operand 0, single buffered']
    #allocation3 [shape = 's32[1]{0}', space=sflag, size = 0x4, scoped, tag = 'scoped memory for tpu_custom_call.1']
    %6 = vsyncpa [#allocation3], 0
    // Predicated region
    $region2: #{tpu_custom_call.1} parent=1 // pred_check
      _
    $region3: #{tpu_custom_call.1} parent=1 // pred_check_branch
      %8 = sbr.rel (0) target = $region5
    $region4: #{tpu_custom_call.1} parent=1 // pred_region
      _
    $region5: #{tpu_custom_call.1} parent=1 // pred_fallthru
      _
    %v9 = vld [vmem:[%s0] sm:$0xff]
    %v10 = vld [vmem:[%s0 + $0x8] sm:$0x3]
    %v11 = vld [vmem:[%s0 + $0x10] sm:$0xff]
    %v12 = vld [vmem:[%s0 + $0x18] sm:$0x3]
    %v13 = vld [vmem:[%s0 + $0x20] sm:$0xff]
    %v14 = vld [vmem:[%s0 + $0x28] sm:$0x3]
    %v15 = vld [vmem:[%s0 + $0x30] sm:$0xff]
    %v16 = vld [vmem:[%s0 + $0x38] sm:$0x3]
    %v17 = vld [vmem:[%s0 + $0x40] sm:$0xff]
    %v18 = vld [vmem:[%s0 + $0x48] sm:$0x3]
    %v19 = vld [vmem:[%s0 + $0x50] sm:$0xff]
    %v20 = vld [vmem:[%s0 + $0x58] sm:$0x3]
    %vm21 = vcmask 490496
    %v22 = vsel %vm21, %v9, -inf
    %23 = vmax.xlane.f32.xlu0 %v22
    %v24 = vpop.xlane.xlu0 %23
    %vm25 = vcmask 484352
    %v26 = vsel %vm25, %v10, -inf
    %27 = vmax.xlane.f32.xlu0 %v26
    %v28 = vpop.xlane.xlu0 %27
    %v29 = vsel %vm21, %v11, -inf
    %30 = vmax.xlane.f32.xlu0 %v29
    %v31 = vpop.xlane.xlu0 %30
    %v32 = vsel %vm25, %v12, -inf
    %33 = vmax.xlane.f32.xlu0 %v32
    %v34 = vpop.xlane.xlu0 %33
    %v35 = vsel %vm21, %v13, -inf
    %36 = vmax.xlane.f32.xlu0 %v35
    %v37 = vpop.xlane.xlu0 %36
    %v38 = vsel %vm25, %v14, -inf
    %39 = vmax.xlane.f32.xlu0 %v38
    %v40 = vpop.xlane.xlu0 %39
    %v41 = vsel %vm21, %v15, -inf
    %42 = vmax.xlane.f32.xlu0 %v41
    %v43 = vpop.xlane.xlu0 %42
    %v44 = vsel %vm25, %v16, -inf
    %45 = vmax.xlane.f32.xlu0 %v44
    %v46 = vpop.xlane.xlu0 %45
    %v47 = vsel %vm21, %v17, -inf
    %48 = vmax.xlane.f32.xlu0 %v47
    %v49 = vpop.xlane.xlu0 %48
    %v50 = vsel %vm25, %v18, -inf
    %51 = vmax.xlane.f32.xlu0 %v50
    %v52 = vpop.xlane.xlu0 %51
    %v53 = vsel %vm21, %v19, -inf
    %54 = vmax.xlane.f32.xlu0 %v53
    %v55 = vpop.xlane.xlu0 %54
    %v56 = vsel %vm25, %v20, -inf
    %57 = vmax.xlane.f32.xlu0 %v56
    %v58 = vpop.xlane.xlu0 %57
    %v59 = vsub.f32 %v9, %v24
    %v60 = vsub.f32 %v10, %v28
    %v61 = vsub.f32 %v11, %v31
    %v62 = vsub.f32 %v12, %v34
    %v63 = vsub.f32 %v13, %v37
    %v64 = vsub.f32 %v14, %v40
    %v65 = vsub.f32 %v15, %v43
    %v66 = vsub.f32 %v16, %v46
    %v67 = vsub.f32 %v17, %v49
    %v68 = vsub.f32 %v18, %v52
    %v69 = vsub.f32 %v19, %v55
    %v70 = vsub.f32 %v20, %v58
    %v71 = vmul.f32 %v59, 1.442695
    %v72 = vpow.pop %v71
    %v73 = vmul.f32 %v60, 1.442695
    %v74 = vpow.pop %v73
    %v75 = vmul.f32 %v61, 1.442695
    %v76 = vpow.pop %v75
    %v77 = vmul.f32 %v62, 1.442695
    %v78 = vpow.pop %v77
    %v79 = vmul.f32 %v63, 1.442695
    %v80 = vpow.pop %v79
    %v81 = vmul.f32 %v64, 1.442695
    %v82 = vpow.pop %v81
    %v83 = vmul.f32 %v65, 1.442695
    %v84 = vpow.pop %v83
    %v85 = vmul.f32 %v66, 1.442695
    %v86 = vpow.pop %v85
    %v87 = vmul.f32 %v67, 1.442695
    %v88 = vpow.pop %v87
    %v89 = vmul.f32 %v68, 1.442695
    %v90 = vpow.pop %v89
    %v91 = vmul.f32 %v69, 1.442695
    %v92 = vpow.pop %v91
    %v93 = vmul.f32 %v70, 1.442695
    %v94 = vpow.pop %v93
    %v95 = vsel %vm21, %v72, 0.0
    %96 = vadd.xlane.f32.xlu0 %v95
    %v97 = vpop.xlane.xlu0 %96
    %v98 = vsel %vm25, %v74, 0.0
    %99 = vadd.xlane.f32.xlu0 %v98
    %v100 = vpop.xlane.xlu0 %99
    %v101 = vsel %vm21, %v76, 0.0
    %102 = vadd.xlane.f32.xlu0 %v101
    %v103 = vpop.xlane.xlu0 %102
    %v104 = vsel %vm25, %v78, 0.0
    %105 = vadd.xlane.f32.xlu0 %v104
    %v106 = vpop.xlane.xlu0 %105
    %v107 = vsel %vm21, %v80, 0.0
    %108 = vadd.xlane.f32.xlu0 %v107
    %v109 = vpop.xlane.xlu0 %108
    %v110 = vsel %vm25, %v82, 0.0
    %111 = vadd.xlane.f32.xlu0 %v110
    %v112 = vpop.xlane.xlu0 %111
    %v113 = vsel %vm21, %v84, 0.0
    %114 = vadd.xlane.f32.xlu0 %v113
    %v115 = vpop.xlane.xlu0 %114
    %v116 = vsel %vm25, %v86, 0.0
    %117 = vadd.xlane.f32.xlu0 %v116
    %v118 = vpop.xlane.xlu0 %117
    %v119 = vsel %vm21, %v88, 0.0
    %120 = vadd.xlane.f32.xlu0 %v119
    %v121 = vpop.xlane.xlu0 %120
    %v122 = vsel %vm25, %v90, 0.0
    %123 = vadd.xlane.f32.xlu0 %v122
    %v124 = vpop.xlane.xlu0 %123
    %v125 = vsel %vm21, %v92, 0.0
    %126 = vadd.xlane.f32.xlu0 %v125
    %v127 = vpop.xlane.xlu0 %126
    %v128 = vsel %vm25, %v94, 0.0
    %129 = vadd.xlane.f32.xlu0 %v128
    %v130 = vpop.xlane.xlu0 %129
    %v131 = vrcp.pop %v97
    %v132 = vmul.f32 %v72, %v131
    %v133 = vrcp.pop %v100
    %v134 = vmul.f32 %v74, %v133
    %v135 = vrcp.pop %v103
    %v136 = vmul.f32 %v76, %v135
    %v137 = vrcp.pop %v106
    %v138 = vmul.f32 %v78, %v137
    %v139 = vrcp.pop %v109
    %v140 = vmul.f32 %v80, %v139
    %v141 = vrcp.pop %v112
    %v142 = vmul.f32 %v82, %v141
    %v143 = vrcp.pop %v115
    %v144 = vmul.f32 %v84, %v143
    %v145 = vrcp.pop %v118
    %v146 = vmul.f32 %v86, %v145
    %v147 = vrcp.pop %v121
    %v148 = vmul.f32 %v88, %v147
    %v149 = vrcp.pop %v124
    %v150 = vmul.f32 %v90, %v149
    %v151 = vrcp.pop %v127
    %v152 = vmul.f32 %v92, %v151
    %v153 = vrcp.pop %v130
    %v154 = vmul.f32 %v94, %v153
    %v155 = vsel %vm21, %v132, 0.0
    %v156 = vsel %vm25, %v134, 0.0
    %v157 = vadd.f32 %v155, %v156
    %v158 = vrot.slane %v157, 4
    %v159 = vadd.f32 %v157, %v158
    %v160 = vrot.slane %v159, 2
    %v161 = vadd.f32 %v159, %v160
    %v162 = vrot.slane %v161, 1
    %v163 = vadd.f32 %v161, %v162
    %v164 = vsel %vm21, %v136, 0.0
    %v165 = vsel %vm25, %v138, 0.0
    %v166 = vadd.f32 %v164, %v165
    %v167 = vrot.slane %v166, 4
    %v168 = vadd.f32 %v166, %v167
    %v169 = vrot.slane %v168, 2
    %v170 = vadd.f32 %v168, %v169
    %v171 = vrot.slane %v170, 1
    %v172 = vadd.f32 %v170, %v171
    %v173 = vsel %vm21, %v140, 0.0
    %v174 = vsel %vm25, %v142, 0.0
    %v175 = vadd.f32 %v173, %v174
    %v176 = vrot.slane %v175, 4
    %v177 = vadd.f32 %v175, %v176
    %v178 = vrot.slane %v177, 2
    %v179 = vadd.f32 %v177, %v178
    %v180 = vrot.slane %v179, 1
    %v181 = vadd.f32 %v179, %v180
    %v182 = vsel %vm21, %v144, 0.0
    %v183 = vsel %vm25, %v146, 0.0
    %v184 = vadd.f32 %v182, %v183
    %v185 = vrot.slane %v184, 4
    %v186 = vadd.f32 %v184, %v185
    %v187 = vrot.slane %v186, 2
    %v188 = vadd.f32 %v186, %v187
    %v189 = vrot.slane %v188, 1
    %v190 = vadd.f32 %v188, %v189
    %v191 = vsel %vm21, %v148, 0.0
    %v192 = vsel %vm25, %v150, 0.0
    %v193 = vadd.f32 %v191, %v192
    %v194 = vrot.slane %v193, 4
    %v195 = vadd.f32 %v193, %v194
    %v196 = vrot.slane %v195, 2
    %v197 = vadd.f32 %v195, %v196
    %v198 = vrot.slane %v197, 1
    %v199 = vadd.f32 %v197, %v198
    %v200 = vsel %vm21, %v152, 0.0
    %v201 = vsel %vm25, %v154, 0.0
    %v202 = vadd.f32 %v200, %v201
    %v203 = vrot.slane %v202, 4
    %v204 = vadd.f32 %v202, %v203
    %v205 = vrot.slane %v204, 2
    %v206 = vadd.f32 %v204, %v205
    %v207 = vrot.slane %v206, 1
    %v208 = vadd.f32 %v206, %v207
    %v209 = vmul.f32 %v163, 0.1
    %v210 = vmul.f32 %v172, 0.1
    %v211 = vmul.f32 %v181, 0.1
    %v212 = vmul.f32 %v190, 0.1
    %v213 = vmul.f32 %v199, 0.1
    %v214 = vmul.f32 %v208, 0.1
    %vm221 = vcmask 1041409
    %v222 = vsel %vm221, %v210, %v209
    %vm223 = vcmask 1042434
    %v224 = vsel %vm223, %v211, %v222
    %vm225 = vcmask 1043459
    %v226 = vsel %vm225, %v212, %v224
    %vm227 = vcmask 1044484
    %v228 = vsel %vm227, %v213, %v226
    %vm229 = vcmask 1045509
    %v230 = vsel %vm229, %v214, %v228
    %vm232 = vcmask 488448
    %233 = vst.msk [vmem:[#allocation2] sm:$0x3f] %vm232, %v230
    // Predicated region
    $region6: #{tpu_custom_call.1} parent=1 // pred_check
      _
    $region7: #{tpu_custom_call.1} parent=1 // pred_check_branch
      %235 = sbr.rel (0) target = $region9
    $region8: #{tpu_custom_call.1} parent=1 // pred_region
      %s237 = ssub.s32 128, 128
      %238 = vsyncadd [#allocation3], %s237
      %s240 = sshll.u32 [#allocation2], 4
      %s241 = int_to_ptr.vmem [resolvable:$true] %s240
      %243 = dma.vmem_to_hbm [thread:$0]  %s241, 128, %s1, [#allocation3]
    $region9: #{tpu_custom_call.1} parent=1 // pred_fallthru
      _
    // Predicated region
    $region10: #{tpu_custom_call.1} parent=1 // pred_check
      _
    $region11: #{tpu_custom_call.1} parent=1 // pred_check_branch
      %245 = sbr.rel (0) target = $region13
    $region12: #{tpu_custom_call.1} parent=1 // pred_region
      %246 = dma.done [#allocation3], 128
    $region13: #{tpu_custom_call.1} parent=1 // pred_fallthru
      _
    %247 = vsyncpa [#allocation3], 1

</llo_original>
